<compile_context>
chip_gen: v7x
topology: tpu7x:2x2x1
jax: 0.10.0
libtpu: 0.0.40
codegen_flags: <defaults>
</compile_context>

<pallas_src>
import functools

import jax
import jax.numpy as jnp
from jax import lax
from jax.experimental import pallas as pl
from jax.experimental.pallas import tpu as pltpu

_NEG_BIG = jnp.float32(-9e15)  # DAEGC mask value


# --------------------------------------------------------------------------------------
# Helpers
# --------------------------------------------------------------------------------------
def _round_up(x, m):
    return ((x + m - 1) // m) * m


def _tpu_vmem_capacity():
    try:
        info = pltpu.get_tpu_info()
        return int(getattr(info, "vmem_capacity_bytes", 128 << 20))
    except Exception:
        return 128 << 20


def _vmem_limit(est_bytes, cap):
    # Leave headroom for compiler temporaries; on v7x (64 MiB/TC) this caps at ~51 MiB.
    ceiling = int(cap * 4 // 5)
    return int(min(max(int(est_bytes * 3 // 2) + (4 << 20), 16 << 20), ceiling))


def _pick_tile(n_pad, cap):
    # 512-wide tiles on 128 MiB parts (v5e/v6e), 256 on 64 MiB parts (v7x).
    ceiling = 512 if cap >= (96 << 20) else 256
    for t in (512, 256, 128):
        if t <= ceiling and n_pad % t == 0:
            return t
    return 128


# --------------------------------------------------------------------------------------
# Kernels
# --------------------------------------------------------------------------------------
def _proj_kernel(x_ref, w_ref, a_ref, h_ref, s_ref):
    """h = x @ W (stored bf16) ; s = h @ [a_self | a_neigh] (both attention projections)."""
    h = jnp.dot(x_ref[...], w_ref[...], preferred_element_type=jnp.float32)
    h_ref[...] = h.astype(h_ref.dtype)  # bf16 writeback -> bf16 MXU operand downstream
    s_ref[...] = jnp.dot(h, a_ref[...], preferred_element_type=jnp.float32)


def _attn_kernel(bias_ref, m_ref, ss_ref, sn_ref, h_ref, o_ref,
                 mx_sc, l_sc, acc_sc, *, alpha, normalize):
    """Flash-style (TQ, TK) step: masked LeakyReLU scores -> online softmax -> acc += e @ h."""
    j = pl.program_id(1)

    @pl.when(j == 0)
    def _():
        mx_sc[...] = jnp.full_like(mx_sc, -jnp.inf)
        l_sc[...] = jnp.zeros_like(l_sc)
        acc_sc[...] = jnp.zeros_like(acc_sc)

    s = (ss_ref[...] + sn_ref[...]) * m_ref[...].astype(jnp.float32)  # (TQ,1)+(1,TK) -> (TQ,TK)
    s = jnp.maximum(s, alpha * s)                                     # LeakyReLU(alpha)
    s = s + bias_ref[...].astype(jnp.float32)                         # additive adjacency mask

    m_new = jnp.maximum(mx_sc[...], jnp.max(s, axis=1, keepdims=True))
    corr = jnp.exp(mx_sc[...] - m_new)
    e = jnp.exp(s - m_new)
    l_sc[...] = corr * l_sc[...] + jnp.sum(e, axis=1, keepdims=True)
    acc_sc[...] = corr * acc_sc[...] + jnp.dot(
        e.astype(jnp.bfloat16), h_ref[...], preferred_element_type=jnp.float32)
    mx_sc[...] = m_new

    @pl.when(j == pl.num_programs(1) - 1)
    def _():
        # Exact reciprocal on the (TQ,1) denominator; scale applied after the matmul.
        hp = acc_sc[...] * (1.0 / l_sc[...])
        # ELU (concat=True path).
        # TODO(synk): switch to expm1 when a Mosaic lowering for it is available.
        hp = jnp.where(hp > 0, hp, jnp.exp(jnp.minimum(hp, 0.0)) - 1.0)
        if normalize:  # fused F.normalize(h, p=2, dim=1)
            hp = hp * lax.rsqrt(jnp.maximum(
                jnp.sum(hp * hp, axis=1, keepdims=True), jnp.float32(1e-24)))
        o_ref[...] = hp


def _decode_kernel(zq_ref, zkt_ref, o_ref):
    """A_pred (TQ, TK) tile = sigmoid(z_tile @ zT_tile), bf16 in / bf16 out, f32 accumulate."""
    logits = jnp.dot(zq_ref[...], zkt_ref[...], preferred_element_type=jnp.float32)
    o_ref[...] = pl.reciprocal(1.0 + jnp.exp(-logits), approx=True).astype(o_ref.dtype)


# --------------------------------------------------------------------------------------
# pallas_call wrappers
# --------------------------------------------------------------------------------------
def _proj(x, w, a_cat, *, block_q, cap):
    n, fin = x.shape
    fp = w.shape[1]
    est = (2 * (block_q * fin * 4 + block_q * fp * 2 + block_q * 2 * 4)  # streamed tiles
           + 2 * (fin * fp * 4 + fp * 2 * 4)                             # residents (2x buffered)
           + 2 * block_q * fp * 4)                                       # f32 temps
    return pl.pallas_call(
        _proj_kernel,
        out_shape=(jax.ShapeDtypeStruct((n, fp), jnp.bfloat16),
                   jax.ShapeDtypeStruct((n, 2), jnp.float32)),
        grid_spec=pltpu.PrefetchScalarGridSpec(
            num_scalar_prefetch=0,
            grid=(n // block_q,),
            in_specs=[pl.BlockSpec((block_q, fin), lambda i: (i, 0)),
                      pl.BlockSpec((fin, fp), lambda i: (0, 0)),
                      pl.BlockSpec((fp, 2), lambda i: (0, 0))],
            out_specs=[pl.BlockSpec((block_q, fp), lambda i: (i, 0)),
                       pl.BlockSpec((block_q, 2), lambda i: (i, 0))]),
        compiler_params=pltpu.CompilerParams(
            dimension_semantics=("parallel",),
            vmem_limit_bytes=_vmem_limit(est, cap)),
    )(x, w, a_cat)


def _attn(bias, m, s_self, s_neigh, h, *, alpha, normalize, tile, cap):
    n = bias.shape[0]
    fp = h.shape[1]
    kernel = functools.partial(_attn_kernel, alpha=alpha, normalize=normalize)
    est = (2 * (2 * tile * tile * 2        # bias + M tiles (bf16), double-buffered
                + tile * 4 + tile * 4      # self column + neigh row
                + tile * fp * 2            # h column tile (bf16)
                + tile * fp * 4)           # output tile (f32)
           + tile * (fp + 2) * 4           # scratch acc / m / l
           + 3 * tile * tile * 4)          # f32 temporaries
    return pl.pallas_call(
        kernel,
        out_shape=jax.ShapeDtypeStruct((n, fp), jnp.float32),
        grid_spec=pltpu.PrefetchScalarGridSpec(
            num_scalar_prefetch=0,
            grid=(n // tile, n // tile),
            in_specs=[pl.BlockSpec((tile, tile), lambda i, j: (i, j)),  # adjacency bias (bf16)
                      pl.BlockSpec((tile, tile), lambda i, j: (i, j)),  # M tile (bf16)
                      pl.BlockSpec((tile, 1), lambda i, j: (i, 0)),     # self scores column
                      pl.BlockSpec((1, tile), lambda i, j: (0, j)),     # neigh scores row
                      pl.BlockSpec((tile, fp), lambda i, j: (j, 0))],   # h_lin column tile (bf16)
            out_specs=pl.BlockSpec((tile, fp), lambda i, j: (i, 0)),
            scratch_shapes=[pltpu.VMEM((tile, 1), jnp.float32),   # running max
                            pltpu.VMEM((tile, 1), jnp.float32),   # running denom
                            pltpu.VMEM((tile, fp), jnp.float32)]),  # running acc
        compiler_params=pltpu.CompilerParams(
            dimension_semantics=("parallel", "arbitrary"),
            vmem_limit_bytes=_vmem_limit(est, cap)),
    )(bias, m, s_self, s_neigh, h)


def _decode(z_bf, zt_bf, *, tile, cap):
    n, fp = z_bf.shape
    est = 2 * (tile * fp * 2 + fp * tile * 2 + tile * tile * 2) + 2 * tile * tile * 4
    return pl.pallas_call(
        _decode_kernel,
        out_shape=jax.ShapeDtypeStruct((n, n), jnp.bfloat16),
        grid_spec=pltpu.PrefetchScalarGridSpec(
            num_scalar_prefetch=0,
            grid=(n // tile, n // tile),
            in_specs=[pl.BlockSpec((tile, fp), lambda i, j: (i, 0)),   # z row tile
                      pl.BlockSpec((fp, tile), lambda i, j: (0, j))],  # z^T column tile
            out_specs=pl.BlockSpec((tile, tile), lambda i, j: (i, j))),
        compiler_params=pltpu.CompilerParams(
            dimension_semantics=("parallel", "parallel"),
            vmem_limit_bytes=_vmem_limit(est, cap)),
    )(z_bf, zt_bf)


# --------------------------------------------------------------------------------------
# Full forward
# --------------------------------------------------------------------------------------
def gat_forward(x, adj, M, params, alpha):
    x = jnp.asarray(x, jnp.float32)
    adj = jnp.asarray(adj, jnp.float32)
    M = jnp.asarray(M, jnp.float32)

    n, fin = x.shape
    hid = params["W1"].shape[1]
    emb = params["W2"].shape[1]
    fp1 = _round_up(hid, 128)
    fp2 = _round_up(emb, 128)

    cap = _tpu_vmem_capacity()
    n_pad = _round_up(n, 128)
    tile = _pick_tile(n_pad, cap)

    def pad2(a, rows, cols):
        a = jnp.asarray(a, jnp.float32)
        return jnp.pad(a, ((0, rows - a.shape[0]), (0, cols - a.shape[1])))

    # Zero-pad feature dims to 128 lanes (exact: zeros propagate through the whole forward).
    w1 = pad2(params["W1"], fin, fp1)
    w2 = pad2(params["W2"], fp1, fp2)
    a1 = pad2(jnp.concatenate([params["a_self1"], params["a_neigh1"]], axis=1), fp1, 2)
    a2 = pad2(jnp.concatenate([params["a_self2"], params["a_neigh2"]], axis=1), fp2, 2)

    x_p = jnp.pad(x, ((0, n_pad - n), (0, 0)))
    # Compressed N^2 side streams: additive adjacency bias (0 / -9e15) + M, both bf16.
    bias = jnp.where(adj > 0, jnp.float32(0.0), _NEG_BIG).astype(jnp.bfloat16)
    bias = jnp.pad(bias, ((0, n_pad - n), (0, n_pad - n)), constant_values=-9e15)
    m_p = jnp.pad(M.astype(jnp.bfloat16), ((0, n_pad - n), (0, n_pad - n)))

    # ---- layer 1 ----
    h1_lin, s1 = _proj(x_p, w1, a1, block_q=tile, cap=cap)
    h1 = _attn(bias, m_p, s1[:, 0:1], s1[:, 1:2].T, h1_lin,
               alpha=alpha, normalize=False, tile=tile, cap=cap)
    # ---- layer 2 (+ fused F.normalize) ----
    h2_lin, s2 = _proj(h1, w2, a2, block_q=tile, cap=cap)
    z_pad = _attn(bias, m_p, s2[:, 0:1], s2[:, 1:2].T, h2_lin,
                  alpha=alpha, normalize=True, tile=tile, cap=cap)
    # ---- dot-product decode (bf16 operands, bf16 A_pred write, f32 returned) ----
    z_bf = z_pad.astype(jnp.bfloat16)
    a_pred_pad = _decode(z_bf, z_bf.T, tile=tile, cap=cap)

    return a_pred_pad[:n, :n].astype(jnp.float32), z_pad[:n, :emb]


# --------------------------------------------------------------------------------------
if __name__ == "__main__":
    N, F_IN, HIDDEN, EMB = 64, 32, 32, 16
    ALPHA = 0.2

    key = jax.random.PRNGKey(0)
    keys = jax.random.split(key, 8)

    def xavier_uniform(k, shape, gain=1.414):
        fan_in, fan_out = shape
        bound = gain * (6.0 / (fan_in + fan_out)) ** 0.5
        return jax.random.uniform(k, shape, jnp.float32, -bound, bound)

    params = {
        "W1":       xavier_uniform(keys[0], (F_IN, HIDDEN)),
        "a_self1":  xavier_uniform(keys[1], (HIDDEN, 1)),
        "a_neigh1": xavier_uniform(keys[2], (HIDDEN, 1)),
        "W2":       xavier_uniform(keys[3], (HIDDEN, EMB)),
        "a_self2":  xavier_uniform(keys[4], (EMB, 1)),
        "a_neigh2": xavier_uniform(keys[5], (EMB, 1)),
    }

    x = jax.random.normal(keys[6], (N, F_IN), jnp.float32)

    # Symmetric adjacency with self-loops; M = row-normalized proximity (DAEGC-style).
    adj_rand = (jax.random.uniform(keys[7], (N, N)) < 0.2).astype(jnp.float32)
    adj = jnp.maximum(adj_rand, adj_rand.T)
    adj = jnp.maximum(adj, jnp.eye(N, dtype=jnp.float32))
    M = adj / jnp.sum(adj, axis=1, keepdims=True)

    a_pred, z = jax.block_until_ready(gat_forward(x, adj, M, params, ALPHA))

    # Pure-JAX f32 reference (loose tolerance: bf16 side-streams / bf16 MXU operands /
    # approx-reciprocal sigmoid in the kernel path).
    def ref_forward(x, adj, M, p, alpha):
        def layer(h_in, W, a_s, a_n):
            h = h_in @ W
            att = (h @ a_s) + (h @ a_n).T
            att = att * M
            att = jnp.where(att > 0, att, alpha * att)
            att = jnp.where(adj > 0, att, -9e15)
            att = jax.nn.softmax(att, axis=1)
            return jax.nn.elu(att @ h)
        h1 = layer(x, p["W1"], p["a_self1"], p["a_neigh1"])
        h2 = layer(h1, p["W2"], p["a_self2"], p["a_neigh2"])
        nrm = jnp.maximum(jnp.sqrt(jnp.sum(h2 * h2, axis=1, keepdims=True)), 1e-12)
        zz = h2 / nrm
        return jax.nn.sigmoid(zz @ zz.T), zz

    a_expected, z_expected = ref_forward(x, adj, M, params, ALPHA)
    assert a_pred.shape == (N, N) and z.shape == (N, EMB)
    assert jnp.allclose(a_pred, a_expected, atol=2e-2, rtol=2e-2)
    assert jnp.allclose(z, z_expected, atol=2e-2, rtol=2e-2)
    print("KERNEL_OK")
</pallas_src>

<mosaic_0001>
module attributes {stable_mosaic.version = 11 : i64} {
  func.func @_proj_kernel(%arg0: i32, %arg1: memref<128x32xf32, #tpu.memory_space<vmem>>, %arg2: memref<32x128xf32, #tpu.memory_space<vmem>>, %arg3: memref<128x2xf32, #tpu.memory_space<vmem>>, %arg4: memref<128x128xbf16, #tpu.memory_space<vmem>>, %arg5: memref<128x2xf32, #tpu.memory_space<vmem>>) attributes {dimension_semantics = [#tpu.dimension_semantics<parallel>], iteration_bounds = array<i64: 1>, scalar_prefetch = 0 : i64, scratch_operands = 0 : i64, tpu.core_type = #tpu.core_type<tc>, window_params = [{transform_indices = @transform_0, window_bounds = array<i64: 128, 32>}, {pipeline_mode = #tpu.pipeline_mode<synchronous>, transform_indices = @transform_1, window_bounds = array<i64: 32, 128>}, {pipeline_mode = #tpu.pipeline_mode<synchronous>, transform_indices = @transform_2, window_bounds = array<i64: 128, 2>}, {transform_indices = @transform_3, window_bounds = array<i64: 128, 128>}, {transform_indices = @transform_4, window_bounds = array<i64: 128, 2>}]} {
    %c0 = arith.constant 0 : index
    %c0_0 = arith.constant 0 : index
    %0 = vector.load %arg1[%c0, %c0_0] : memref<128x32xf32, #tpu.memory_space<vmem>>, vector<128x32xf32>
    %c0_1 = arith.constant 0 : index
    %c0_2 = arith.constant 0 : index
    %1 = vector.load %arg2[%c0_1, %c0_2] : memref<32x128xf32, #tpu.memory_space<vmem>>, vector<32x128xf32>
    %cst = arith.constant dense<0.000000e+00> : vector<128x128xf32>
    %2 = tpu.matmul %0, %1, %cst {dimension_numbers = #tpu.dot_dimension_numbers<[1], [0], [0], [1], [0, 0, 1, 1], [], []>} : vector<128x32xf32>, vector<32x128xf32>, vector<128x128xf32> -> vector<128x128xf32>
    %3 = arith.truncf %2 : vector<128x128xf32> to vector<128x128xbf16>
    %c0_3 = arith.constant 0 : index
    %c0_4 = arith.constant 0 : index
    %4 = vector.load %arg4[%c0_3, %c0_4] : memref<128x128xbf16, #tpu.memory_space<vmem>>, vector<128x128xbf16>
    tpu.vector_store %arg4[%c0_3, %c0_4], %3 {strides = array<i32>} : memref<128x128xbf16, #tpu.memory_space<vmem>>, vector<128x128xbf16>,
    %c0_5 = arith.constant 0 : index
    %c0_6 = arith.constant 0 : index
    %5 = vector.load %arg3[%c0_5, %c0_6] : memref<128x2xf32, #tpu.memory_space<vmem>>, vector<128x2xf32>
    %cst_7 = arith.constant dense<0.000000e+00> : vector<128x2xf32>
    %6 = tpu.matmul %2, %5, %cst_7 {dimension_numbers = #tpu.dot_dimension_numbers<[1], [0], [0], [1], [0, 0, 1, 1], [], []>} : vector<128x128xf32>, vector<128x2xf32>, vector<128x2xf32> -> vector<128x2xf32>
    %c0_8 = arith.constant 0 : index
    %c0_9 = arith.constant 0 : index
    %7 = vector.load %arg5[%c0_8, %c0_9] : memref<128x2xf32, #tpu.memory_space<vmem>>, vector<128x2xf32>
    tpu.vector_store %arg5[%c0_8, %c0_9], %6 {strides = array<i32>} : memref<128x2xf32, #tpu.memory_space<vmem>>, vector<128x2xf32>,
    return
  }
  func.func @transform_0(%arg0: i32) -> (i32, i32) {
    %c0_i32 = arith.constant 0 : i32
    %c0_i32_0 = arith.constant 0 : i32
    return %arg0, %c0_i32 : i32, i32
  }
  func.func @transform_1(%arg0: i32) -> (i32, i32) {
    %c0_i32 = arith.constant 0 : i32
    %c0_i32_0 = arith.constant 0 : i32
    %c0_i32_1 = arith.constant 0 : i32
    return %c0_i32, %c0_i32_0 : i32, i32
  }
  func.func @transform_2(%arg0: i32) -> (i32, i32) {
    %c0_i32 = arith.constant 0 : i32
    %c0_i32_0 = arith.constant 0 : i32
    %c0_i32_1 = arith.constant 0 : i32
    return %c0_i32, %c0_i32_0 : i32, i32
  }
  func.func @transform_3(%arg0: i32) -> (i32, i32) {
    %c0_i32 = arith.constant 0 : i32
    %c0_i32_0 = arith.constant 0 : i32
    return %arg0, %c0_i32 : i32, i32
  }
  func.func @transform_4(%arg0: i32) -> (i32, i32) {
    %c0_i32 = arith.constant 0 : i32
    %c0_i32_0 = arith.constant 0 : i32
    return %arg0, %c0_i32 : i32, i32
  }
}

</mosaic_0001>

<llo_original>
// kernel: tpu_custom_call.1
$region0: #{tpu_custom_call.1}
  #allocation0 [shape = 'u32[]', space=smem, size = 0x4, offset = 0x4, fixed_abs, tag = 'smem constant byte address 0x4 - core index']
  #allocation1 [shape = 'u32[144,128]{1,0:T(1,128)}', space=vmem, size = 0x12000, scoped, tag = 'internal scratch']
  %s0 = inlined_call_operand.vmem [shape: f32[128,32], index: 0, kind: input, shape index: {}]
  %s1 = inlined_call_operand.vmem [shape: f32[32,128], index: 1, kind: input, shape index: {}]
  %s2 = inlined_call_operand.vmem [shape: f32[128,2], index: 2, kind: input, shape index: {}]
  %s3 = inlined_call_operand.hbm [shape: bf16[128,128], index: 3, kind: output, shape index: {0}]
  %s4 = inlined_call_operand.vmem [shape: f32[128,2], index: 4, kind: output, shape index: {1}]
  %5 = xla_tuple %s3, %s4
  %s6 = sld [smem:[#allocation0]]
  $region30: #{tpu_custom_call.1} parent=0
    _
  %s8 = ssub.s32 1, %s6
  %s9 = scalar_select 0, %s8, %s6
  $region1: #{tpu_custom_call.1} parent=0
    #allocation2 [shape = 'u8[32768]{0}', space=vmem, size = 0x8000, scoped, tag = 'output window, operand 0, single buffered']
    #allocation3 [shape = 's32[1]{0}', space=sflag, size = 0x4, scoped, tag = 'scoped memory for tpu_custom_call.1']
    %10 = vsyncpa [#allocation3], 0
    // Predicated region
    $region2: #{tpu_custom_call.1} parent=1 // pred_check
      _
    $region3: #{tpu_custom_call.1} parent=1 // pred_check_branch
      %12 = sbr.rel (0) target = $region5
    $region4: #{tpu_custom_call.1} parent=1 // pred_region
      _
    $region5: #{tpu_custom_call.1} parent=1 // pred_fallthru
      _
    // Predicated region
    $region6: #{tpu_custom_call.1} parent=1 // pred_check
      _
    $region7: #{tpu_custom_call.1} parent=1 // pred_check_branch
      %14 = sbr.rel (0) target = $region9
    $region8: #{tpu_custom_call.1} parent=1 // pred_region
      _
    $region9: #{tpu_custom_call.1} parent=1 // pred_fallthru
      _
    // Predicated region
    $region10: #{tpu_custom_call.1} parent=1 // pred_check
      _
    $region11: #{tpu_custom_call.1} parent=1 // pred_check_branch
      %16 = sbr.rel (0) target = $region13
    $region12: #{tpu_custom_call.1} parent=1 // pred_region
      _
    $region13: #{tpu_custom_call.1} parent=1 // pred_fallthru
      _
    %v17 = vld [vmem:[%s0] sm:$0xff]
    %v18 = vld [vmem:[%s0 + $0x8] sm:$0xff]
    %v19 = vld [vmem:[%s0 + $0x10] sm:$0xff]
    %v20 = vld [vmem:[%s0 + $0x18] sm:$0xff]
    %v21 = vld [vmem:[%s0 + $0x20] sm:$0xff]
    %v22 = vld [vmem:[%s0 + $0x28] sm:$0xff]
    %v23 = vld [vmem:[%s0 + $0x30] sm:$0xff]
    %v24 = vld [vmem:[%s0 + $0x38] sm:$0xff]
    %v25 = vld [vmem:[%s0 + $0x40] sm:$0xff]
    %v26 = vld [vmem:[%s0 + $0x48] sm:$0xff]
    %v27 = vld [vmem:[%s0 + $0x50] sm:$0xff]
    %v28 = vld [vmem:[%s0 + $0x58] sm:$0xff]
    %v29 = vld [vmem:[%s0 + $0x60] sm:$0xff]
    %v30 = vld [vmem:[%s0 + $0x68] sm:$0xff]
    %v31 = vld [vmem:[%s0 + $0x70] sm:$0xff]
    %v32 = vld [vmem:[%s0 + $0x78] sm:$0xff]
    %v33 = vld [vmem:[%s1] sm:$0xff]
    %v34 = vld [vmem:[%s1 + $0x8] sm:$0xff]
    %v35 = vld [vmem:[%s1 + $0x10] sm:$0xff]
    %v36 = vld [vmem:[%s1 + $0x18] sm:$0xff]
    %vm37 = vcmask 261120
    %v39 = vsel %vm37, %v17, 0
    %v42 = vsel %vm37, %v18, 0
    %v45 = vsel %vm37, %v19, 0
    %v48 = vsel %vm37, %v20, 0
    %v51 = vsel %vm37, %v21, 0
    %v54 = vsel %vm37, %v22, 0
    %v57 = vsel %vm37, %v23, 0
    %v60 = vsel %vm37, %v24, 0
    %v63 = vsel %vm37, %v25, 0
    %v66 = vsel %vm37, %v26, 0
    %v69 = vsel %vm37, %v27, 0
    %v72 = vsel %vm37, %v28, 0
    %v75 = vsel %vm37, %v29, 0
    %v78 = vsel %vm37, %v30, 0
    %v81 = vsel %vm37, %v31, 0
    %v84 = vsel %vm37, %v32, 0
    %86 = vmatprep.subr.mxu0 0.0
    %87 = vmatpush1.msra.mxu0 %v33
    %88 = vmatprep.subr.mxu0 0.0
    %89 = vmatpush1.msra.mxu0 %v34
    %90 = vmatprep.subr.mxu0 0.0
    %91 = vmatpush1.msra.mxu0 %v35
    %92 = vmatprep.subr.mxu0 0.0
    %93 = vmatpush1.msra.mxu0 %v36
    %94 = vmatprep.subr.mxu0 0.0
    %95 = vmatpush1.msra.mxu0 0.0
    %96 = vmatprep.subr.mxu0 0.0
    %97 = vmatpush1.msra.mxu0 0.0
    %98 = vmatprep.subr.mxu0 0.0
    %99 = vmatpush1.msra.mxu0 0.0
    %100 = vmatprep.subr.mxu0 0.0
    %101 = vmatpush1.msra.mxu0 0.0
    %102 = vmatprep.subr.mxu0 0.0
    %103 = vmatpush1.msra.mxu0 0.0
    %104 = vmatprep.subr.mxu0 0.0
    %105 = vmatpush1.msra.mxu0 0.0
    %106 = vmatprep.subr.mxu0 0.0
    %107 = vmatpush1.msra.mxu0 0.0
    %108 = vmatprep.subr.mxu0 0.0
    %109 = vmatpush1.msra.mxu0 0.0
    %110 = vmatprep.subr.mxu0 0.0
    %111 = vmatpush1.msra.mxu0 0.0
    %112 = vmatprep.subr.mxu0 0.0
    %113 = vmatpush1.msra.mxu0 0.0
    %114 = vmatprep.subr.mxu0 0.0
    %115 = vmatpush1.msra.mxu0 0.0
    %116 = vmatprep.subr.mxu0 0.0
    %117 = vmatpush1.msra.mxu0 0.0
    %118 = vmatprep.subr.mxu0 0.0
    %119 = vmatpush1.msra.mxu0 0.0
    %120 = vmatprep.subr.mxu0 0.0
    %121 = vmatpush1.msra.mxu0 0.0
    %122 = vmatprep.subr.mxu0 0.0
    %123 = vmatpush1.msra.mxu0 0.0
    %124 = vmatprep.subr.mxu0 0.0
    %125 = vmatpush1.msra.mxu0 0.0
    %126 = vmatprep.subr.mxu0 0.0
    %127 = vmatpush1.msra.mxu0 0.0
    %128 = vmatprep.subr.mxu0 0.0
    %129 = vmatpush1.msra.mxu0 0.0
    %130 = vmatprep.subr.mxu0 0.0
    %131 = vmatpush1.msra.mxu0 0.0
    %132 = vmatprep.subr.mxu0 0.0
    %133 = vmatpush1.msra.mxu0 0.0
    %134 = vmatprep.subr.mxu0 0.0
    %135 = vmatpush1.msra.mxu0 0.0
    %136 = vmatprep.subr.mxu0 0.0
    %137 = vmatpush1.msra.mxu0 0.0
    %138 = vmatprep.subr.mxu0 0.0
    %139 = vmatpush1.msra.mxu0 0.0
    %140 = vmatprep.subr.mxu0 0.0
    %141 = vmatpush1.msra.mxu0 0.0
    %142 = vmatprep.subr.mxu0 0.0
    %143 = vmatpush1.msra.mxu0 0.0
    %144 = vmatprep.subr.mxu0 0.0
    %145 = vmatpush1.msra.mxu0 0.0
    %146 = vmatprep.subr.mxu0 0.0
    %147 = vmatpush1.msra.mxu0 0.0
    %148 = vmatprep.subr.mxu0 0.0
    %149 = vmatpush1.msra.mxu0 0.0
    %150 = vmatprep.mubr.f32.mxu0 0.0
    %151 = vmatmul.mubr.f32.gmra.mrb[0].mxu0 %v39
    %v152 = vpop.f32.mrb[0].mxu0
    %v153 = vadd.f32 0.0, %v152
    %v154 = vpop.f32.mrb[0].mxu0
    %155 = vmatprep.mubr.f32.mxu0 0.0
    %156 = vmatmul.mubr.f32.gmra.mrb[0].mxu0 %v42
    %v157 = vpop.f32.mrb[0].mxu0
    %v158 = vadd.f32 0.0, %v157
    %v159 = vpop.f32.mrb[0].mxu0
    %160 = vmatprep.mubr.f32.mxu0 0.0
    %161 = vmatmul.mubr.f32.gmra.mrb[0].mxu0 %v45
    %v162 = vpop.f32.mrb[0].mxu0
    %v163 = vadd.f32 0.0, %v162
    %v164 = vpop.f32.mrb[0].mxu0
    %165 = vmatprep.mubr.f32.mxu0 0.0
    %166 = vmatmul.mubr.f32.gmra.mrb[0].mxu0 %v48
    %v167 = vpop.f32.mrb[0].mxu0
    %v168 = vadd.f32 0.0, %v167
    %v169 = vpop.f32.mrb[0].mxu0
    %170 = vmatprep.mubr.f32.mxu0 0.0
    %171 = vmatmul.mubr.f32.gmra.mrb[0].mxu0 %v51
    %v172 = vpop.f32.mrb[0].mxu0
    %v173 = vadd.f32 0.0, %v172
    %v174 = vpop.f32.mrb[0].mxu0
    %175 = vmatprep.mubr.f32.mxu0 0.0
    %176 = vmatmul.mubr.f32.gmra.mrb[0].mxu0 %v54
    %v177 = vpop.f32.mrb[0].mxu0
    %v178 = vadd.f32 0.0, %v177
    %v179 = vpop.f32.mrb[0].mxu0
    %180 = vmatprep.mubr.f32.mxu0 0.0
    %181 = vmatmul.mubr.f32.gmra.mrb[0].mxu0 %v57
    %v182 = vpop.f32.mrb[0].mxu0
    %v183 = vadd.f32 0.0, %v182
    %v184 = vpop.f32.mrb[0].mxu0
    %185 = vmatprep.mubr.f32.mxu0 0.0
    %186 = vmatmul.mubr.f32.gmra.mrb[0].mxu0 %v60
    %v187 = vpop.f32.mrb[0].mxu0
    %v188 = vadd.f32 0.0, %v187
    %v189 = vpop.f32.mrb[0].mxu0
    %190 = vmatprep.mubr.f32.mxu0 0.0
    %191 = vmatmul.mubr.f32.gmra.mrb[0].mxu0 %v63
    %v192 = vpop.f32.mrb[0].mxu0
    %v193 = vadd.f32 0.0, %v192
    %v194 = vpop.f32.mrb[0].mxu0
    %195 = vmatprep.mubr.f32.mxu0 0.0
    %196 = vmatmul.mubr.f32.gmra.mrb[0].mxu0 %v66
    %v197 = vpop.f32.mrb[0].mxu0
    %v198 = vadd.f32 0.0, %v197
    %v199 = vpop.f32.mrb[0].mxu0
    %200 = vmatprep.mubr.f32.mxu0 0.0
    %201 = vmatmul.mubr.f32.gmra.mrb[0].mxu0 %v69
    %v202 = vpop.f32.mrb[0].mxu0
    %v203 = vadd.f32 0.0, %v202
    %v204 = vpop.f32.mrb[0].mxu0
    %205 = vmatprep.mubr.f32.mxu0 0.0
    %206 = vmatmul.mubr.f32.gmra.mrb[0].mxu0 %v72
    %v207 = vpop.f32.mrb[0].mxu0
    %v208 = vadd.f32 0.0, %v207
    %v209 = vpop.f32.mrb[0].mxu0
    %210 = vmatprep.mubr.f32.mxu0 0.0
    %211 = vmatmul.mubr.f32.gmra.mrb[0].mxu0 %v75
    %v212 = vpop.f32.mrb[0].mxu0
    %v213 = vadd.f32 0.0, %v212
    %v214 = vpop.f32.mrb[0].mxu0
    %215 = vmatprep.mubr.f32.mxu0 0.0
    %216 = vmatmul.mubr.f32.gmra.mrb[0].mxu0 %v78
    %v217 = vpop.f32.mrb[0].mxu0
    %v218 = vadd.f32 0.0, %v217
    %v219 = vpop.f32.mrb[0].mxu0
    %220 = vmatprep.mubr.f32.mxu0 0.0
    %221 = vmatmul.mubr.f32.gmra.mrb[0].mxu0 %v81
    %v222 = vpop.f32.mrb[0].mxu0
    %v223 = vadd.f32 0.0, %v222
    %v224 = vpop.f32.mrb[0].mxu0
    %225 = vmatprep.mubr.f32.mxu0 0.0
    %226 = vmatmul.mubr.f32.gmra.mrb[0].mxu0 %v84
    %v227 = vpop.f32.mrb[0].mxu0
    %v228 = vadd.f32 0.0, %v227
    %v229 = vpop.f32.mrb[0].mxu0
    %230 = vdwg.mxu0
    %v231 = vpack.c.bf16 %v158, %v153
    %v232 = vpack.c.bf16 %v168, %v163
    %v233 = vpack.c.bf16 %v178, %v173
    %v234 = vpack.c.bf16 %v188, %v183
    %v235 = vpack.c.bf16 %v198, %v193
    %v236 = vpack.c.bf16 %v208, %v203
    %v237 = vpack.c.bf16 %v218, %v213
    %v238 = vpack.c.bf16 %v228, %v223
    %v247 = vunpack.c.l.b16 %v231
    %v248 = vunpack.c.h.b16 %v231
    %v249 = vunpack.c.l.b16 %v232
    %v250 = vunpack.c.h.b16 %v232
    %v251 = vunpack.c.l.b16 %v233
    %v252 = vunpack.c.h.b16 %v233
    %v253 = vunpack.c.l.b16 %v234
    %v254 = vunpack.c.h.b16 %v234
    %v255 = vunpack.c.l.b16 %v235
    %v256 = vunpack.c.h.b16 %v235
    %v257 = vunpack.c.l.b16 %v236
    %v258 = vunpack.c.h.b16 %v236
    %v259 = vunpack.c.l.b16 %v237
    %v260 = vunpack.c.h.b16 %v237
    %v261 = vunpack.c.l.b16 %v238
    %v262 = vunpack.c.h.b16 %v238
    %v263 = vpack.c.b16 %v247, %v247
    %v264 = vpack.c.b16 %v248, %v248
    %v265 = vpack.c.b16 %v249, %v249
    %v266 = vpack.c.b16 %v250, %v250
    %v267 = vpack.c.b16 %v251, %v251
    %v268 = vpack.c.b16 %v252, %v252
    %v269 = vpack.c.b16 %v253, %v253
    %v270 = vpack.c.b16 %v254, %v254
    %v271 = vpack.c.b16 %v255, %v255
    %v272 = vpack.c.b16 %v256, %v256
    %v273 = vpack.c.b16 %v257, %v257
    %v274 = vpack.c.b16 %v258, %v258
    %v275 = vpack.c.b16 %v259, %v259
    %v276 = vpack.c.b16 %v260, %v260
    %v277 = vpack.c.b16 %v261, %v261
    %v278 = vpack.c.b16 %v262, %v262
    %295 = vst [vmem:[#allocation2] sm:$0xf] %v263
    %296 = vst [vmem:[#allocation2 + $0x4] sm:$0xf] %v264
    %297 = vst [vmem:[#allocation2 + $0x8] sm:$0xf] %v265
    %298 = vst [vmem:[#allocation2 + $0xc] sm:$0xf] %v266
    %299 = vst [vmem:[#allocation2 + $0x10] sm:$0xf] %v267
    %300 = vst [vmem:[#allocation2 + $0x14] sm:$0xf] %v268
    %301 = vst [vmem:[#allocation2 + $0x18] sm:$0xf] %v269
    %302 = vst [vmem:[#allocation2 + $0x1c] sm:$0xf] %v270
    %303 = vst [vmem:[#allocation2 + $0x20] sm:$0xf] %v271
    %304 = vst [vmem:[#allocation2 + $0x24] sm:$0xf] %v272
    %305 = vst [vmem:[#allocation2 + $0x28] sm:$0xf] %v273
    %306 = vst [vmem:[#allocation2 + $0x2c] sm:$0xf] %v274
    %307 = vst [vmem:[#allocation2 + $0x30] sm:$0xf] %v275
    %308 = vst [vmem:[#allocation2 + $0x34] sm:$0xf] %v276
    %309 = vst [vmem:[#allocation2 + $0x38] sm:$0xf] %v277
    %310 = vst [vmem:[#allocation2 + $0x3c] sm:$0xf] %v278
    %v311 = vld [vmem:[%s2] sm:$0xff]
    %v312 = vld [vmem:[%s2 + $0x8] sm:$0xff]
    %v313 = vld [vmem:[%s2 + $0x10] sm:$0xff]
    %v314 = vld [vmem:[%s2 + $0x18] sm:$0xff]
    %v315 = vld [vmem:[%s2 + $0x20] sm:$0xff]
    %v316 = vld [vmem:[%s2 + $0x28] sm:$0xff]
    %v317 = vld [vmem:[%s2 + $0x30] sm:$0xff]
    %v318 = vld [vmem:[%s2 + $0x38] sm:$0xff]
    %v319 = vld [vmem:[%s2 + $0x40] sm:$0xff]
    %v320 = vld [vmem:[%s2 + $0x48] sm:$0xff]
    %v321 = vld [vmem:[%s2 + $0x50] sm:$0xff]
    %v322 = vld [vmem:[%s2 + $0x58] sm:$0xff]
    %v323 = vld [vmem:[%s2 + $0x60] sm:$0xff]
    %v324 = vld [vmem:[%s2 + $0x68] sm:$0xff]
    %v325 = vld [vmem:[%s2 + $0x70] sm:$0xff]
    %v326 = vld [vmem:[%s2 + $0x78] sm:$0xff]
    %327 = vmatprep.subr.mxu0 0.0
    %328 = vmatpush1.msra.mxu0 %v311
    %329 = vmatprep.subr.mxu0 0.0
    %330 = vmatpush1.msra.mxu0 %v312
    %331 = vmatprep.subr.mxu0 0.0
    %332 = vmatpush1.msra.mxu0 %v313
    %333 = vmatprep.subr.mxu0 0.0
    %334 = vmatpush1.msra.mxu0 %v314
    %335 = vmatprep.subr.mxu0 0.0
    %336 = vmatpush1.msra.mxu0 %v315
    %337 = vmatprep.subr.mxu0 0.0
    %338 = vmatpush1.msra.mxu0 %v316
    %339 = vmatprep.subr.mxu0 0.0
    %340 = vmatpush1.msra.mxu0 %v317
    %341 = vmatprep.subr.mxu0 0.0
    %342 = vmatpush1.msra.mxu0 %v318
    %343 = vmatprep.subr.mxu0 0.0
    %344 = vmatpush1.msra.mxu0 %v319
    %345 = vmatprep.subr.mxu0 0.0
    %346 = vmatpush1.msra.mxu0 %v320
    %347 = vmatprep.subr.mxu0 0.0
    %348 = vmatpush1.msra.mxu0 %v321
    %349 = vmatprep.subr.mxu0 0.0
    %350 = vmatpush1.msra.mxu0 %v322
    %351 = vmatprep.subr.mxu0 0.0
    %352 = vmatpush1.msra.mxu0 %v323
    %353 = vmatprep.subr.mxu0 0.0
    %354 = vmatpush1.msra.mxu0 %v324
    %355 = vmatprep.subr.mxu0 0.0
    %356 = vmatpush1.msra.mxu0 %v325
    %357 = vmatprep.subr.mxu0 0.0
    %358 = vmatpush1.msra.mxu0 %v326
    %359 = vmatprep.subr.mxu0 0.0
    %360 = vmatpush1.msra.mxu0 0.0
    %361 = vmatprep.subr.mxu0 0.0
    %362 = vmatpush1.msra.mxu0 0.0
    %363 = vmatprep.subr.mxu0 0.0
    %364 = vmatpush1.msra.mxu0 0.0
    %365 = vmatprep.subr.mxu0 0.0
    %366 = vmatpush1.msra.mxu0 0.0
    %367 = vmatprep.subr.mxu0 0.0
    %368 = vmatpush1.msra.mxu0 0.0
    %369 = vmatprep.subr.mxu0 0.0
    %370 = vmatpush1.msra.mxu0 0.0
    %371 = vmatprep.subr.mxu0 0.0
    %372 = vmatpush1.msra.mxu0 0.0
    %373 = vmatprep.subr.mxu0 0.0
    %374 = vmatpush1.msra.mxu0 0.0
    %375 = vmatprep.subr.mxu0 0.0
    %376 = vmatpush1.msra.mxu0 0.0
    %377 = vmatprep.subr.mxu0 0.0
    %378 = vmatpush1.msra.mxu0 0.0
    %379 = vmatprep.subr.mxu0 0.0
    %380 = vmatpush1.msra.mxu0 0.0
    %381 = vmatprep.subr.mxu0 0.0
    %382 = vmatpush1.msra.mxu0 0.0
    %383 = vmatprep.subr.mxu0 0.0
    %384 = vmatpush1.msra.mxu0 0.0
    %385 = vmatprep.subr.mxu0 0.0
    %386 = vmatpush1.msra.mxu0 0.0
    %387 = vmatprep.subr.mxu0 0.0
    %388 = vmatpush1.msra.mxu0 0.0
    %389 = vmatprep.subr.mxu0 0.0
    %390 = vmatpush1.msra.mxu0 0.0
    %391 = vmatprep.mubr.f32.mxu0 0.0
    %392 = vmatmul.mubr.f32.gmra.mrb[0].mxu0 %v153
    %v393 = vpop.f32.mrb[0].mxu0
    %v394 = vadd.f32 0.0, %v393
    %v395 = vpop.f32.mrb[0].mxu0
    %396 = vmatprep.mubr.f32.mxu0 0.0
    %397 = vmatmul.mubr.f32.gmra.mrb[0].mxu0 %v158
    %v398 = vpop.f32.mrb[0].mxu0
    %v399 = vadd.f32 0.0, %v398
    %v400 = vpop.f32.mrb[0].mxu0
    %401 = vmatprep.mubr.f32.mxu0 0.0
    %402 = vmatmul.mubr.f32.gmra.mrb[0].mxu0 %v163
    %v403 = vpop.f32.mrb[0].mxu0
    %v404 = vadd.f32 0.0, %v403
    %v405 = vpop.f32.mrb[0].mxu0
    %406 = vmatprep.mubr.f32.mxu0 0.0
    %407 = vmatmul.mubr.f32.gmra.mrb[0].mxu0 %v168
    %v408 = vpop.f32.mrb[0].mxu0
    %v409 = vadd.f32 0.0, %v408
    %v410 = vpop.f32.mrb[0].mxu0
    %411 = vmatprep.mubr.f32.mxu0 0.0
    %412 = vmatmul.mubr.f32.gmra.mrb[0].mxu0 %v173
    %v413 = vpop.f32.mrb[0].mxu0
    %v414 = vadd.f32 0.0, %v413
    %v415 = vpop.f32.mrb[0].mxu0
    %416 = vmatprep.mubr.f32.mxu0 0.0
    %417 = vmatmul.mubr.f32.gmra.mrb[0].mxu0 %v178
    %v418 = vpop.f32.mrb[0].mxu0
    %v419 = vadd.f32 0.0, %v418
    %v420 = vpop.f32.mrb[0].mxu0
    %421 = vmatprep.mubr.f32.mxu0 0.0
    %422 = vmatmul.mubr.f32.gmra.mrb[0].mxu0 %v183
    %v423 = vpop.f32.mrb[0].mxu0
    %v424 = vadd.f32 0.0, %v423
    %v425 = vpop.f32.mrb[0].mxu0
    %426 = vmatprep.mubr.f32.mxu0 0.0
    %427 = vmatmul.mubr.f32.gmra.mrb[0].mxu0 %v188
    %v428 = vpop.f32.mrb[0].mxu0
    %v429 = vadd.f32 0.0, %v428
    %v430 = vpop.f32.mrb[0].mxu0
    %431 = vmatprep.mubr.f32.mxu0 0.0
    %432 = vmatmul.mubr.f32.gmra.mrb[0].mxu0 %v193
    %v433 = vpop.f32.mrb[0].mxu0
    %v434 = vadd.f32 0.0, %v433
    %v435 = vpop.f32.mrb[0].mxu0
    %436 = vmatprep.mubr.f32.mxu0 0.0
    %437 = vmatmul.mubr.f32.gmra.mrb[0].mxu0 %v198
    %v438 = vpop.f32.mrb[0].mxu0
    %v439 = vadd.f32 0.0, %v438
    %v440 = vpop.f32.mrb[0].mxu0
    %441 = vmatprep.mubr.f32.mxu0 0.0
    %442 = vmatmul.mubr.f32.gmra.mrb[0].mxu0 %v203
    %v443 = vpop.f32.mrb[0].mxu0
    %v444 = vadd.f32 0.0, %v443
    %v445 = vpop.f32.mrb[0].mxu0
    %446 = vmatprep.mubr.f32.mxu0 0.0
    %447 = vmatmul.mubr.f32.gmra.mrb[0].mxu0 %v208
    %v448 = vpop.f32.mrb[0].mxu0
    %v449 = vadd.f32 0.0, %v448
    %v450 = vpop.f32.mrb[0].mxu0
    %451 = vmatprep.mubr.f32.mxu0 0.0
    %452 = vmatmul.mubr.f32.gmra.mrb[0].mxu0 %v213
    %v453 = vpop.f32.mrb[0].mxu0
    %v454 = vadd.f32 0.0, %v453
    %v455 = vpop.f32.mrb[0].mxu0
    %456 = vmatprep.mubr.f32.mxu0 0.0
    %457 = vmatmul.mubr.f32.gmra.mrb[0].mxu0 %v218
    %v458 = vpop.f32.mrb[0].mxu0
    %v459 = vadd.f32 0.0, %v458
    %v460 = vpop.f32.mrb[0].mxu0
    %461 = vmatprep.mubr.f32.mxu0 0.0
    %462 = vmatmul.mubr.f32.gmra.mrb[0].mxu0 %v223
    %v463 = vpop.f32.mrb[0].mxu0
    %v464 = vadd.f32 0.0, %v463
    %v465 = vpop.f32.mrb[0].mxu0
    %466 = vmatprep.mubr.f32.mxu0 0.0
    %467 = vmatmul.mubr.f32.gmra.mrb[0].mxu0 %v228
    %v468 = vpop.f32.mrb[0].mxu0
    %v469 = vadd.f32 0.0, %v468
    %v470 = vpop.f32.mrb[0].mxu0
    %471 = vdwg.mxu0
    %vm472 = vcmask 15360
    %473 = vst.msk [vmem:[%s4] sm:$0xff] %vm472, %v394
    %474 = vst.msk [vmem:[%s4 + $0x8] sm:$0xff] %vm472, %v399
    %475 = vst.msk [vmem:[%s4 + $0x10] sm:$0xff] %vm472, %v404
    %476 = vst.msk [vmem:[%s4 + $0x18] sm:$0xff] %vm472, %v409
    %477 = vst.msk [vmem:[%s4 + $0x20] sm:$0xff] %vm472, %v414
    %478 = vst.msk [vmem:[%s4 + $0x28] sm:$0xff] %vm472, %v419
    %479 = vst.msk [vmem:[%s4 + $0x30] sm:$0xff] %vm472, %v424
    %480 = vst.msk [vmem:[%s4 + $0x38] sm:$0xff] %vm472, %v429
    %481 = vst.msk [vmem:[%s4 + $0x40] sm:$0xff] %vm472, %v434
    %482 = vst.msk [vmem:[%s4 + $0x48] sm:$0xff] %vm472, %v439
    %483 = vst.msk [vmem:[%s4 + $0x50] sm:$0xff] %vm472, %v444
    %484 = vst.msk [vmem:[%s4 + $0x58] sm:$0xff] %vm472, %v449
    %485 = vst.msk [vmem:[%s4 + $0x60] sm:$0xff] %vm472, %v454
    %486 = vst.msk [vmem:[%s4 + $0x68] sm:$0xff] %vm472, %v459
    %487 = vst.msk [vmem:[%s4 + $0x70] sm:$0xff] %vm472, %v464
    %488 = vst.msk [vmem:[%s4 + $0x78] sm:$0xff] %vm472, %v469
    // Predicated region
    $region14: #{tpu_custom_call.1} parent=1 // pred_check
      _
    $region15: #{tpu_custom_call.1} parent=1 // pred_check_branch
      %490 = sbr.rel (0) target = $region17
    $region16: #{tpu_custom_call.1} parent=1 // pred_region
      %s492 = ssub.s32 1024, 1024
      %493 = vsyncadd [#allocation3], %s492
      %s494 = sshll.u32 [#allocation2], 4
      %s495 = int_to_ptr.vmem [resolvable:$true] %s494
      %500 = dma.vmem_to_hbm [thread:$0]  %s495, 1024, %s3, [#allocation3], 64, 64, 4
    $region17: #{tpu_custom_call.1} parent=1 // pred_fallthru
      _
    // Predicated region
    $region18: #{tpu_custom_call.1} parent=1 // pred_check
      _
    $region19: #{tpu_custom_call.1} parent=1 // pred_check_branch
      %502 = sbr.rel (0) target = $region21
    $region20: #{tpu_custom_call.1} parent=1 // pred_region
      _
    $region21: #{tpu_custom_call.1} parent=1 // pred_fallthru
      _
    // Predicated region
    $region22: #{tpu_custom_call.1} parent=1 // pred_check
      _
    $region23: #{tpu_custom_call.1} parent=1 // pred_check_branch
      %504 = sbr.rel (0) target = $region25
    $region24: #{tpu_custom_call.1} parent=1 // pred_region
      %505 = dma.done [#allocation3], 1024
    $region25: #{tpu_custom_call.1} parent=1 // pred_fallthru
      _
    // Predicated region
    $region26: #{tpu_custom_call.1} parent=1 // pred_check
      _
    $region27: #{tpu_custom_call.1} parent=1 // pred_check_branch
      %507 = sbr.rel (0) target = $region29
    $region28: #{tpu_custom_call.1} parent=1 // pred_region
      _
    $region29: #{tpu_custom_call.1} parent=1 // pred_fallthru
      _
    %508 = vsyncpa [#allocation3], 1

</llo_original>
